<compile_context>
chip_gen: v6e
topology: v6e:2x2x1
jax: 0.10.0
libtpu: 0.0.40
codegen_flags: <defaults>
</compile_context>

<pallas_src>
import jax
import jax.numpy as jnp
from jax.experimental import pallas as pl
from jax.experimental.pallas import tpu as pltpu


# ---------------------------------------------------------------------------
# One-time parameter packing (init-side, not per-forward)
# ---------------------------------------------------------------------------
def prep_sylvester_params(A, B, b):
    """A: (dim, M), B: (M, dim), b: (M,)  ->  (bmat, amat, at, bias), M padded to 8."""
    dim, M = A.shape
    mp = max(8, ((M + 7) // 8) * 8)          # pad the M axis to a full sublane tile
    f32 = jnp.float32
    bmat = jnp.zeros((mp, dim), f32).at[:M, :].set(B.astype(f32))    # (8, dim)
    amat = jnp.zeros((dim, mp), f32).at[:, :M].set(A.astype(f32))    # (dim, 8)
    at = jnp.zeros((mp, dim), f32).at[:M, :].set(A.T.astype(f32))    # (8, dim) latency path
    bias = jnp.zeros((mp, 1), f32).at[:M, 0].set(b.astype(f32))      # (8, 1)
    return bmat, amat, at, bias


# ---------------------------------------------------------------------------
# Batched throughput kernel: zc is a (dim, TILE_N) tile of column vectors
# ---------------------------------------------------------------------------
def _sylvester_batch_kernel(zc_ref, bmat_ref, amat_ref, bias_ref, o_ref):
    # zc_ref: (dim, TN)  bmat: (8, dim)  amat: (dim, 8)  bias: (8, 1)  o: (dim, TN)
    z = zc_ref[...]                                                    # (dim, TN)
    lin = jnp.dot(bmat_ref[...], z,
                  preferred_element_type=jnp.float32) + bias_ref[...]  # (8, TN)
    h = jnp.tanh(lin)                                                  # (8, TN) lane-dense
    o_ref[...] = z + jnp.dot(amat_ref[...], h,
                             preferred_element_type=jnp.float32)       # (dim, TN)


def _pick_tile_n(n):
    for t in (1024, 512, 256, 128):
        if n % t == 0:
            return t
    # non-multiple batch: wrapper pads N up to the next multiple of 128 (or 512 if big)
    return 512 if n > 512 else 128


def sylvester_forward_batched(zc, bmat, amat, bias, *, tile_n=None):
    """zc: (dim, N) batch of column vectors -> (dim, N). f32 in, f32 out."""
    dim, n = zc.shape
    mp = bmat.shape[0]
    tn = tile_n if tile_n is not None else _pick_tile_n(n)

    n_pad = ((n + tn - 1) // tn) * tn
    zin = zc if n_pad == n else jnp.pad(zc, ((0, 0), (0, n_pad - n)))

    out = pl.pallas_call(
        _sylvester_batch_kernel,
        out_shape=jax.ShapeDtypeStruct((dim, n_pad), jnp.float32),
        grid=(n_pad // tn,),
        in_specs=[
            pl.BlockSpec((dim, tn), lambda i: (0, i)),     # streamed z columns
            pl.BlockSpec((mp, dim), lambda i: (0, 0)),     # B (padded), resident
            pl.BlockSpec((dim, mp), lambda i: (0, 0)),     # A (padded), resident
            pl.BlockSpec((mp, 1), lambda i: (0, 0)),       # b (padded), resident
        ],
        out_specs=pl.BlockSpec((dim, tn), lambda i: (0, i)),
        compiler_params=pltpu.CompilerParams(
            dimension_semantics=("parallel",)),
    )(zin, bmat, amat, bias)
    return out if n_pad == n else out[:, :n]


# ---------------------------------------------------------------------------
# Single-vector latency kernel: gridless, no MXU (XLU reduces + EUP tanh + VPU)
# ---------------------------------------------------------------------------
def _sylvester_vec_kernel(z_ref, bmat_ref, at_ref, bias_ref, o_ref):
    # z: (1, dim)  bmat: (8, dim)  at: (8, dim) = A^T padded  bias: (8, 1)
    z = z_ref[...]                                                        # (1, dim)
    lin = jnp.sum(bmat_ref[...] * z, axis=1, keepdims=True) + bias_ref[...]  # (8, 1)
    h = jnp.tanh(lin)                                                     # (8, 1)
    o_ref[...] = z + jnp.sum(h * at_ref[...], axis=0, keepdims=True)      # (1, dim)


def sylvester_forward(z, bmat, at, bias):
    """Module-faithful forward: z: (dim,) -> (dim,)."""
    dim = z.shape[0]
    out = pl.pallas_call(
        _sylvester_vec_kernel,
        out_shape=jax.ShapeDtypeStruct((1, dim), jnp.float32),
        in_specs=[pl.BlockSpec(memory_space=pltpu.MemorySpace.VMEM)] * 4,
        out_specs=pl.BlockSpec(memory_space=pltpu.MemorySpace.VMEM),
    )(z.reshape(1, dim), bmat, at, bias)
    return out.reshape(dim)


# ---------------------------------------------------------------------------
if __name__ == "__main__":
    dim, M = 64, 5
    key = jax.random.PRNGKey(0)
    k_a, k_b, k_bias, k_z, k_zb, k_zb2 = jax.random.split(key, 6)

    # parameter_init(-0.01, 0.01, size) == Uniform(-0.01, 0.01)
    A = jax.random.uniform(k_a, (dim, M), jnp.float32, minval=-0.01, maxval=0.01)
    B = jax.random.uniform(k_b, (M, dim), jnp.float32, minval=-0.01, maxval=0.01)
    b = jax.random.uniform(k_bias, (M,), jnp.float32, minval=-0.01, maxval=0.01)

    bmat_p, amat_p, at_p, bias_p = prep_sylvester_params(A, B, b)

    # 1) module-faithful single-vector forward (latency path)
    z = jax.random.normal(k_z, (dim,), jnp.float32)
    out_vec = jax.block_until_ready(sylvester_forward(z, bmat_p, at_p, bias_p))
    ref_vec = z + A @ jnp.tanh(B @ z + b)
    assert out_vec.shape == (dim,)
    assert jnp.allclose(out_vec, ref_vec, atol=1e-4, rtol=1e-4)

    # 2) batched throughput path: N column vectors stacked as (dim, N)
    N = 512
    zc = jax.random.normal(k_zb, (dim, N), jnp.float32)
    out_b = jax.block_until_ready(
        sylvester_forward_batched(zc, bmat_p, amat_p, bias_p))
    ref_b = zc + A @ jnp.tanh(B @ zc + b[:, None])
    assert out_b.shape == (dim, N)
    assert jnp.allclose(out_b, ref_b, atol=1e-4, rtol=1e-4)

    # 3) batched path with a batch size that is not a tile multiple (padding path)
    N2 = 200
    zc2 = jax.random.normal(k_zb2, (dim, N2), jnp.float32)
    out_b2 = jax.block_until_ready(
        sylvester_forward_batched(zc2, bmat_p, amat_p, bias_p))
    ref_b2 = zc2 + A @ jnp.tanh(B @ zc2 + b[:, None])
    assert out_b2.shape == (dim, N2)
    assert jnp.allclose(out_b2, ref_b2, atol=1e-4, rtol=1e-4)

    # TODO(synk): log_det() (torch.det of I + diag(h') @ B @ A) is not part of forward()
    # and is not implemented here.
    print("KERNEL_OK")
</pallas_src>

<mosaic_0001>
module attributes {stable_mosaic.version = 11 : i64} {
  func.func @_sylvester_vec_kernel(%arg0: memref<1x64xf32, #tpu.memory_space<vmem>>, %arg1: memref<8x64xf32, #tpu.memory_space<vmem>>, %arg2: memref<8x64xf32, #tpu.memory_space<vmem>>, %arg3: memref<8x1xf32, #tpu.memory_space<vmem>>, %arg4: memref<1x64xf32, #tpu.memory_space<vmem>>) attributes {dimension_semantics = [], scalar_prefetch = 0 : i64, scratch_operands = 0 : i64, tpu.core_type = #tpu.core_type<tc>} {
    %c0 = arith.constant 0 : index
    %c0_0 = arith.constant 0 : index
    %0 = vector.load %arg0[%c0, %c0_0] : memref<1x64xf32, #tpu.memory_space<vmem>>, vector<1x64xf32>
    %c0_1 = arith.constant 0 : index
    %c0_2 = arith.constant 0 : index
    %1 = vector.load %arg1[%c0_1, %c0_2] : memref<8x64xf32, #tpu.memory_space<vmem>>, vector<8x64xf32>
    %2 = vector.broadcast %0 : vector<1x64xf32> to vector<8x64xf32>
    %3 = arith.mulf %1, %2 : vector<8x64xf32>
    %cst = arith.constant dense<0.000000e+00> : vector<8xf32>
    %4 = vector.multi_reduction <add>, %3, %cst [1] : vector<8x64xf32> to vector<8xf32>
    %5 = vector.shape_cast %4 : vector<8xf32> to vector<8x1xf32>
    %c0_3 = arith.constant 0 : index
    %c0_4 = arith.constant 0 : index
    %6 = vector.load %arg3[%c0_3, %c0_4] : memref<8x1xf32, #tpu.memory_space<vmem>>, vector<8x1xf32>
    %7 = arith.addf %5, %6 : vector<8x1xf32>
    %8 = math.tanh %7 : vector<8x1xf32>
    %c0_5 = arith.constant 0 : index
    %c0_6 = arith.constant 0 : index
    %9 = vector.load %arg2[%c0_5, %c0_6] : memref<8x64xf32, #tpu.memory_space<vmem>>, vector<8x64xf32>
    %10 = vector.broadcast %8 : vector<8x1xf32> to vector<8x64xf32>
    %11 = arith.mulf %10, %9 : vector<8x64xf32>
    %cst_7 = arith.constant dense<0.000000e+00> : vector<64xf32>
    %12 = vector.multi_reduction <add>, %11, %cst_7 [0] : vector<8x64xf32> to vector<64xf32>
    %13 = vector.shape_cast %12 : vector<64xf32> to vector<1x64xf32>
    %14 = arith.addf %0, %13 : vector<1x64xf32>
    %c0_8 = arith.constant 0 : index
    %c0_9 = arith.constant 0 : index
    %15 = vector.load %arg4[%c0_8, %c0_9] : memref<1x64xf32, #tpu.memory_space<vmem>>, vector<1x64xf32>
    tpu.vector_store %arg4[%c0_8, %c0_9], %14 {strides = array<i32>} : memref<1x64xf32, #tpu.memory_space<vmem>>, vector<1x64xf32>,
    return
  }
}

</mosaic_0001>

<llo_original>
// kernel: tpu_custom_call.1
$region0: #{tpu_custom_call.1}
  #allocation0 [shape = 'u32[]', space=smem, size = 0x4, offset = 0x4, fixed_abs, tag = 'smem constant byte address 0x4 - core index']
  #allocation1 [shape = 'u32[144,128]{1,0:T(1,128)}', space=vmem, size = 0x12000, scoped, tag = 'internal scratch']
  %s0 = inlined_call_operand.vmem [shape: f32[1,64], index: 0, kind: input, shape index: {}]
  %s1 = inlined_call_operand.vmem [shape: f32[8,64], index: 1, kind: input, shape index: {}]
  %s2 = inlined_call_operand.hbm [shape: f32[8,64], index: 2, kind: input, shape index: {}]
  %s3 = inlined_call_operand.vmem [shape: f32[8,1], index: 3, kind: input, shape index: {}]
  %s4 = inlined_call_operand.hbm [shape: f32[1,64], index: 4, kind: output, shape index: {}]
  %s5 = sld [smem:[#allocation0]]
  $region30: #{tpu_custom_call.1} parent=0
    _
  %s7 = ssub.s32 1, %s5
  %s8 = scalar_select 0, %s7, %s5
  $region1: #{tpu_custom_call.1} parent=0
    #allocation2 [shape = 'u8[4096]{0}', space=vmem, size = 0x1000, scoped, tag = 'input window, operand 2, single buffered']
    #allocation3 [shape = 's32[1]{0}', space=sflag, size = 0x4, scoped, tag = 'scoped memory for tpu_custom_call.1']
    #allocation4 [shape = 's32[1]{0}', space=sflag, size = 0x4, scoped, tag = 'scoped memory for tpu_custom_call.1']
    #allocation5 [shape = 'u8[512]{0}', space=vmem, size = 0x400, scoped, tag = 'output window, operand 0, single buffered']
    %9 = vsyncpa [#allocation3], 0
    %10 = vsyncpa [#allocation4], 0
    // Predicated region
    $region2: #{tpu_custom_call.1} parent=1 // pred_check
      _
    $region3: #{tpu_custom_call.1} parent=1 // pred_check_branch
      %12 = sbr.rel (0) target = $region5
    $region4: #{tpu_custom_call.1} parent=1 // pred_region
      _
    $region5: #{tpu_custom_call.1} parent=1 // pred_fallthru
      _
    // Predicated region
    $region6: #{tpu_custom_call.1} parent=1 // pred_check
      _
    $region7: #{tpu_custom_call.1} parent=1 // pred_check_branch
      %14 = sbr.rel (0) target = $region9
    $region8: #{tpu_custom_call.1} parent=1 // pred_region
      _
    $region9: #{tpu_custom_call.1} parent=1 // pred_fallthru
      _
    // Predicated region
    $region10: #{tpu_custom_call.1} parent=1 // pred_check
      _
    $region11: #{tpu_custom_call.1} parent=1 // pred_check_branch
      %16 = sbr.rel (0) target = $region13
    $region12: #{tpu_custom_call.1} parent=1 // pred_region
      %s18 = ssub.s32 128, 128
      %19 = vsyncadd [#allocation3], %s18
      %s21 = sshll.u32 [#allocation2], 4
      %s22 = int_to_ptr.vmem [resolvable:$true] %s21
      %24 = dma.hbm_to_vmem [thread:$0]  %s2, 128, %s22, [#allocation3]
    $region13: #{tpu_custom_call.1} parent=1 // pred_fallthru
      _
    // Predicated region
    $region14: #{tpu_custom_call.1} parent=1 // pred_check
      _
    $region15: #{tpu_custom_call.1} parent=1 // pred_check_branch
      %26 = sbr.rel (0) target = $region17
    $region16: #{tpu_custom_call.1} parent=1 // pred_region
      _
    $region17: #{tpu_custom_call.1} parent=1 // pred_fallthru
      _
    // Predicated region
    $region18: #{tpu_custom_call.1} parent=1 // pred_check
      _
    $region19: #{tpu_custom_call.1} parent=1 // pred_check_branch
      %28 = sbr.rel (0) target = $region21
    $region20: #{tpu_custom_call.1} parent=1 // pred_region
      %29 = dma.done [#allocation3], 128
    $region21: #{tpu_custom_call.1} parent=1 // pred_fallthru
      _
    %v30 = vld [vmem:[%s0] sm:$0x1]
    %v31 = vld [vmem:[%s1] sm:$0xff]
    %v33 = vlaneseq
    %v34 = vshrl.u32 %v33, 7
    %v35 = vsub.s32 0, %v34
    %v36 = vrot.slane %v30, %v35
    %v38 = vmul.f32 %v31, %v36
    %vm39 = vcmask 523264
    %v40 = vsel %vm39, %v38, 0.0
    %41 = vadd.xlane.f32.xlu0 %v40
    %v42 = vpop.xlane.xlu0 %41
    %v43 = vld [vmem:[%s3] sm:$0xff]
    %v44 = vadd.f32 %v42, %v43
    %v45 = vtanh.pop %v44
    %v46 = vld [vmem:[#allocation2] sm:$0xff]
    %48 = vset.pattern.permute.xlu0 0
    %49 = vperm.xlu0 %48, %v45
    %v50 = vpop.permute.xlu0 %49
    %v52 = vmul.f32 %v50, %v46
    %v53 = vsel %vm39, %v52, 0.0
    %v54 = vrot.slane %v53, 4
    %v55 = vadd.f32 %v53, %v54
    %v56 = vrot.slane %v55, 2
    %v57 = vadd.f32 %v55, %v56
    %v58 = vrot.slane %v57, 1
    %v59 = vadd.f32 %v57, %v58
    %v60 = vadd.f32 %v30, %v59
    %vm61 = vcmask 516096
    %62 = vst.msk [vmem:[#allocation5] sm:$0x1] %vm61, %v60
    // Predicated region
    $region22: #{tpu_custom_call.1} parent=1 // pred_check
      _
    $region23: #{tpu_custom_call.1} parent=1 // pred_check_branch
      %64 = sbr.rel (0) target = $region25
    $region24: #{tpu_custom_call.1} parent=1 // pred_region
      %s66 = ssub.s32 16, 16
      %67 = vsyncadd [#allocation4], %s66
      %s69 = sshll.u32 [#allocation5], 4
      %s70 = int_to_ptr.vmem [resolvable:$true] %s69
      %72 = dma.vmem_to_hbm [thread:$0]  %s70, 16, %s4, [#allocation4]
    $region25: #{tpu_custom_call.1} parent=1 // pred_fallthru
      _
    // Predicated region
    $region26: #{tpu_custom_call.1} parent=1 // pred_check
      _
    $region27: #{tpu_custom_call.1} parent=1 // pred_check_branch
      %74 = sbr.rel (0) target = $region29
    $region28: #{tpu_custom_call.1} parent=1 // pred_region
      %75 = dma.done [#allocation4], 16
    $region29: #{tpu_custom_call.1} parent=1 // pred_fallthru
      _
    %76 = vsyncpa [#allocation3], 1
    %77 = vsyncpa [#allocation4], 1

</llo_original>
